<compile_context>
chip_gen: v7x
topology: tpu7x:2x2x1
jax: 0.10.0
libtpu: 0.0.40
codegen_flags: <defaults>
</compile_context>

<pallas_src>
import jax
import jax.numpy as jnp
from jax.experimental import pallas as pl
from jax.experimental.pallas import tpu as pltpu

# ---------------- Config (mirrors the PyTorch `Config`) ----------------
EMBEDDING_DIM = 34                               # Config.embedding_dim
NUM_FILTERS = 4
KERNEL_SIZE = 3
CONV_OUT_LEN = EMBEDDING_DIM - KERNEL_SIZE + 1   # 32  (valid conv, stride 1)
HIDDEN = NUM_FILTERS * CONV_OUT_LEN              # 128 (flattened conv output)
BN_EPS = 1e-5

# TODO(synk): inp_drop / hidden_drop are inference-mode identity (Dropout.eval()).

# e2 / entity-table path has NO bn0 in the torch forward (conv applied directly
# to emb_e_*.weight), so its fold uses an identity pre-scale.
IDENTITY_FOLD = jnp.array([1.0, 0.0], dtype=jnp.float32)


# ----------------- Host-side fold: conv + BN -> matmul + bias -----------------
def build_decompress_matrix(w, bn0_fold, bnf_fold):
    """Unroll Conv1d(1->F, K, valid) with bn0 (pre) and bn_f (post), eval mode,
    into  out = x @ W_eff + b_eff  with W_eff: (D, HIDDEN), b_eff: (1, HIDDEN).

    w: (F, K) conv weights; bn0_fold: (2,) [scale, shift]; bnf_fold: (2, F)."""
    s0, t0 = bn0_fold[0], bn0_fold[1]
    scale, shift = bnf_fold[0], bnf_fold[1]          # (F,), (F,)
    L = CONV_OUT_LEN
    j = jnp.arange(L)
    W = jnp.zeros((EMBEDDING_DIM, HIDDEN), jnp.float32)
    for f in range(NUM_FILTERS):
        for k in range(KERNEL_SIZE):
            # acc[n, f*L + j] += w[f, k] * x[n, j + k]
            W = W.at[j + k, f * L + j].add(s0 * scale[f] * w[f, k])
    wsum = jnp.sum(w, axis=1)                        # (F,)
    b = jnp.repeat(scale * t0 * wsum + shift, L)     # filter-major (matches .view(bsz,-1))
    return W, b.reshape(1, HIDDEN)


# ------------------------- Entity-tile size selection -------------------------
def pick_ent_tile(E):
    # Biggest lane-dense tile that still leaves >= 4 grid steps (pipelining on
    # all generations; 2-TC megacore split on v7x).  prepare() pads the table
    # up to an even step count.
    for t in (8192, 4096, 2048, 1024, 512, 256):
        if pl.cdiv(E, t) >= 4:
            return t
    return 128


# --------------- One-time parameter preparation (fold + repack) ---------------
def prepare(params, ent_tile):
    bn0 = params["bn0_fold"]
    w1, b1 = build_decompress_matrix(params["w_ent_real"], bn0, params["bn1_fold"])
    w2, b2 = build_decompress_matrix(params["w_rel_real"], bn0, params["bn2_fold"])
    w3, b3 = build_decompress_matrix(params["w_ent_img"], bn0, params["bn3_fold"])
    w4, b4 = build_decompress_matrix(params["w_rel_img"], bn0, params["bn4_fold"])
    w_e2r, b_e2r = build_decompress_matrix(params["w_ent_real"], IDENTITY_FOLD,
                                           params["bn1_fold"])
    w_e2i, b_e2i = build_decompress_matrix(params["w_ent_img"], IDENTITY_FOLD,
                                           params["bn3_fold"])

    E, D = params["emb_e_real"].shape
    steps = max(pl.cdiv(E, ent_tile), 4)
    steps += steps % 2                               # even step count (v7x: 2 TCs)
    E_pad = steps * ent_tile

    def pack(tbl):
        # Pre-transposed, zero-padded, bf16 entity table: (D, E_pad), lane-dense.
        out = jnp.zeros((D, E_pad), jnp.bfloat16)
        return out.at[:, :E].set(tbl.T.astype(jnp.bfloat16))

    return dict(
        emb_e_real=params["emb_e_real"], emb_e_img=params["emb_e_img"],
        emb_rel_real=params["emb_rel_real"], emb_rel_img=params["emb_rel_img"],
        w1=w1, b1=b1, w2=w2, b2=b2, w3=w3, b3=b3, w4=w4, b4=b4,
        w_e2r_t=w_e2r.T, w_e2i_t=w_e2i.T,            # (HIDDEN, D)
        b_e2r_t=b_e2r.T, b_e2i_t=b_e2i.T,            # (HIDDEN, 1)
        e2r_t=pack(params["emb_e_real"]),
        e2i_t=pack(params["emb_e_img"]),
    )


# -------- Pallas kernel: fully-folded ComplEx scoring over entity tiles --------
def score_kernel(ap_ref, cp_ref, beta_ref, e2r_ref, e2i_ref, out_ref):
    # (B,34) bf16 @ (34, ent_tile) bf16 -> f32 accumulate on the MXU.
    pred = jnp.dot(ap_ref[...], e2r_ref[...], preferred_element_type=jnp.float32)
    pred = pred + jnp.dot(cp_ref[...], e2i_ref[...],
                          preferred_element_type=jnp.float32)
    out_ref[...] = jax.nn.sigmoid(pred + beta_ref[...])


def fused_score(ap, cp, beta, e2r_t, e2i_t, ent_tile):
    B, D = ap.shape
    _, E_pad = e2r_t.shape
    steps = E_pad // ent_tile
    lhs_spec = pl.BlockSpec((B, D), lambda j: (0, 0))
    beta_spec = pl.BlockSpec((B, 1), lambda j: (0, 0))
    tab_spec = pl.BlockSpec((D, ent_tile), lambda j: (0, j))
    out_spec = pl.BlockSpec((B, ent_tile), lambda j: (0, j))
    return pl.pallas_call(
        score_kernel,
        out_shape=jax.ShapeDtypeStruct((B, E_pad), jnp.float32),
        grid_spec=pltpu.PrefetchScalarGridSpec(
            num_scalar_prefetch=0,
            grid=(steps,),
            in_specs=[lhs_spec, lhs_spec, beta_spec, tab_spec, tab_spec],
            out_specs=out_spec,
        ),
        compiler_params=pltpu.CompilerParams(
            dimension_semantics=("parallel",),
            vmem_limit_bytes=32 * 1024 * 1024,
        ),
    )(ap, cp, beta, e2r_t, e2i_t)


# ------------------------------ Forward pass ------------------------------
def complex_decompress_forward(prep, e1, rel, *, num_entities, ent_tile):
    # Embedding lookups (glue: plain JAX gather).
    e1r = prep["emb_e_real"][e1[:, 0]]
    e1i = prep["emb_e_img"][e1[:, 0]]
    rlr = prep["emb_rel_real"][rel[:, 0]]
    rli = prep["emb_rel_img"][rel[:, 0]]

    # Batch-side decompress: 4 tiny (B,34)@(34,128) matmuls (jitted XLA glue).
    h_e1r = e1r @ prep["w1"] + prep["b1"]
    h_rlr = rlr @ prep["w2"] + prep["b2"]
    h_e1i = e1i @ prep["w3"] + prep["b3"]
    h_rli = rli @ prep["w4"] + prep["b4"]

    # ComplEx re-association: pred = A @ h_e2r^T + C @ h_e2i^T
    a = h_e1r * h_rlr - h_e1i * h_rli
    c = h_e1r * h_rli + h_e1i * h_rlr

    # Fold the affine entity-table decompress into the LHS.
    ap = (a @ prep["w_e2r_t"]).astype(jnp.bfloat16)       # (B, 34)
    cp = (c @ prep["w_e2i_t"]).astype(jnp.bfloat16)       # (B, 34)
    beta = a @ prep["b_e2r_t"] + c @ prep["b_e2i_t"]      # (B, 1), f32

    out = fused_score(ap, cp, beta, prep["e2r_t"], prep["e2i_t"], ent_tile)
    return out[:, :num_entities]


forward = jax.jit(complex_decompress_forward,
                  static_argnames=("num_entities", "ent_tile"))


# --------------------------- Parameter helpers ---------------------------
def xavier_normal(key, shape, fan_in, fan_out):
    std = (2.0 / (fan_in + fan_out)) ** 0.5
    return std * jax.random.normal(key, shape, dtype=jnp.float32)


def make_bn_params(key, c):
    k1, k2, k3, k4 = jax.random.split(key, 4)
    gamma = 1.0 + 0.1 * jax.random.normal(k1, (c,), jnp.float32)
    beta = 0.1 * jax.random.normal(k2, (c,), jnp.float32)
    mean = 0.1 * jax.random.normal(k3, (c,), jnp.float32)
    var = 1.0 + 0.1 * jax.random.uniform(k4, (c,), jnp.float32)
    return gamma, beta, mean, var


def bn_fold(gamma, beta, mean, var, eps=BN_EPS):
    scale = gamma / jnp.sqrt(var + eps)
    shift = beta - mean * scale
    return jnp.stack([scale, shift], axis=0)          # (2, C)


def init_params(key, num_entities, num_relations):
    ks = jax.random.split(key, 13)
    D = EMBEDDING_DIM

    def emb(k, n):
        w = xavier_normal(k, (n, D), n, D)
        return w.at[0].set(0.0)                        # padding_idx=0

    def conv_w(k):
        # torch Conv1d weight is (out_ch=4, in_ch=1, k=3); xavier fan = (3, 12)
        return xavier_normal(k, (NUM_FILTERS, KERNEL_SIZE), KERNEL_SIZE,
                             NUM_FILTERS * KERNEL_SIZE)

    bn0 = bn_fold(*make_bn_params(ks[8], 1))           # (2, 1)
    return dict(
        emb_e_real=emb(ks[0], num_entities),
        emb_e_img=emb(ks[1], num_entities),
        emb_rel_real=emb(ks[2], num_relations),
        emb_rel_img=emb(ks[3], num_relations),
        w_ent_real=conv_w(ks[4]),
        w_ent_img=conv_w(ks[5]),
        w_rel_real=conv_w(ks[6]),
        w_rel_img=conv_w(ks[7]),
        bn0_fold=bn0[:, 0],                            # (2,) scale/shift
        bn1_fold=bn_fold(*make_bn_params(ks[9], NUM_FILTERS)),
        bn2_fold=bn_fold(*make_bn_params(ks[10], NUM_FILTERS)),
        bn3_fold=bn_fold(*make_bn_params(ks[11], NUM_FILTERS)),
        bn4_fold=bn_fold(*make_bn_params(ks[12], NUM_FILTERS)),
    )


# --------------------------- Pure-JAX reference ---------------------------
def _ref_decompress(x, w, bn0, bnf):
    x = x * bn0[0] + bn0[1]
    L = CONV_OUT_LEN
    outs = []
    for f in range(NUM_FILTERS):
        acc = sum(w[f, k] * x[:, k:k + L] for k in range(KERNEL_SIZE))
        outs.append(acc * bnf[0, f] + bnf[1, f])
    return jnp.concatenate(outs, axis=1)


def reference_forward(params, e1, rel):
    e1r = params["emb_e_real"][e1[:, 0]]
    e1i = params["emb_e_img"][e1[:, 0]]
    rlr = params["emb_rel_real"][rel[:, 0]]
    rli = params["emb_rel_img"][rel[:, 0]]
    bn0 = params["bn0_fold"]
    h_e1r = _ref_decompress(e1r, params["w_ent_real"], bn0, params["bn1_fold"])
    h_rlr = _ref_decompress(rlr, params["w_rel_real"], bn0, params["bn2_fold"])
    h_e1i = _ref_decompress(e1i, params["w_ent_img"], bn0, params["bn3_fold"])
    h_rli = _ref_decompress(rli, params["w_rel_img"], bn0, params["bn4_fold"])
    h_e2r = _ref_decompress(params["emb_e_real"], params["w_ent_real"],
                            IDENTITY_FOLD, params["bn1_fold"])
    h_e2i = _ref_decompress(params["emb_e_img"], params["w_ent_img"],
                            IDENTITY_FOLD, params["bn3_fold"])
    pred = (jnp.dot(h_e1r * h_rlr, h_e2r.T) + jnp.dot(h_e1r * h_rli, h_e2i.T)
            + jnp.dot(h_e1i * h_rlr, h_e2i.T) - jnp.dot(h_e1i * h_rli, h_e2r.T))
    return jax.nn.sigmoid(pred)


# ---------------------------------- Main ----------------------------------
if __name__ == "__main__":
    NUM_ENTITIES = 128
    NUM_RELATIONS = 16
    BSZ = 8

    key = jax.random.PRNGKey(0)
    kp, ke, kr = jax.random.split(key, 3)
    params = init_params(kp, NUM_ENTITIES, NUM_RELATIONS)

    ent_tile = pick_ent_tile(NUM_ENTITIES)
    prep = prepare(params, ent_tile)                   # one-time fold + repack

    e1 = jax.random.randint(ke, (BSZ, 1), 0, NUM_ENTITIES, dtype=jnp.int32)
    rel = jax.random.randint(kr, (BSZ, 1), 0, NUM_RELATIONS, dtype=jnp.int32)

    pred = forward(prep, e1, rel, num_entities=NUM_ENTITIES, ent_tile=ent_tile)
    pred = jax.block_until_ready(pred)

    ref = reference_forward(params, e1, rel)
    assert pred.shape == (BSZ, NUM_ENTITIES), pred.shape
    assert jnp.all(jnp.isfinite(pred))
    max_err = float(jnp.max(jnp.abs(pred - ref)))
    # bf16 entity tables / LHS (fp32 accumulate): sigmoid outputs agree ~1e-2.
    assert jnp.allclose(pred, ref, atol=1e-2, rtol=1e-2), max_err
    print("KERNEL_OK")
</pallas_src>

<mosaic_0001>
module attributes {stable_mosaic.version = 11 : i64} {
  func.func @score_kernel(%arg0: i32, %arg1: memref<8x34xbf16, #tpu.memory_space<vmem>>, %arg2: memref<8x34xbf16, #tpu.memory_space<vmem>>, %arg3: memref<8x1xf32, #tpu.memory_space<vmem>>, %arg4: memref<34x128xbf16, #tpu.memory_space<vmem>>, %arg5: memref<34x128xbf16, #tpu.memory_space<vmem>>, %arg6: memref<8x128xf32, #tpu.memory_space<vmem>>) attributes {dimension_semantics = [#tpu.dimension_semantics<parallel>], iteration_bounds = array<i64: 4>, scalar_prefetch = 0 : i64, scratch_operands = 0 : i64, tpu.core_type = #tpu.core_type<tc>, window_params = [{pipeline_mode = #tpu.pipeline_mode<synchronous>, transform_indices = @transform_0, window_bounds = array<i64: 8, 34>}, {pipeline_mode = #tpu.pipeline_mode<synchronous>, transform_indices = @transform_1, window_bounds = array<i64: 8, 34>}, {pipeline_mode = #tpu.pipeline_mode<synchronous>, transform_indices = @transform_2, window_bounds = array<i64: 8, 1>}, {transform_indices = @transform_3, window_bounds = array<i64: 34, 128>}, {transform_indices = @transform_4, window_bounds = array<i64: 34, 128>}, {transform_indices = @transform_5, window_bounds = array<i64: 8, 128>}]} {
    %c0 = arith.constant 0 : index
    %c0_0 = arith.constant 0 : index
    %0 = vector.load %arg1[%c0, %c0_0] : memref<8x34xbf16, #tpu.memory_space<vmem>>, vector<8x34xbf16>
    %c0_1 = arith.constant 0 : index
    %c0_2 = arith.constant 0 : index
    %1 = vector.load %arg4[%c0_1, %c0_2] : memref<34x128xbf16, #tpu.memory_space<vmem>>, vector<34x128xbf16>
    %cst = arith.constant dense<0.000000e+00> : vector<8x128xf32>
    %2 = tpu.matmul %0, %1, %cst {dimension_numbers = #tpu.dot_dimension_numbers<[1], [0], [0], [1], [0, 0, 1, 1], [], []>} : vector<8x34xbf16>, vector<34x128xbf16>, vector<8x128xf32> -> vector<8x128xf32>
    %c0_3 = arith.constant 0 : index
    %c0_4 = arith.constant 0 : index
    %3 = vector.load %arg2[%c0_3, %c0_4] : memref<8x34xbf16, #tpu.memory_space<vmem>>, vector<8x34xbf16>
    %c0_5 = arith.constant 0 : index
    %c0_6 = arith.constant 0 : index
    %4 = vector.load %arg5[%c0_5, %c0_6] : memref<34x128xbf16, #tpu.memory_space<vmem>>, vector<34x128xbf16>
    %cst_7 = arith.constant dense<0.000000e+00> : vector<8x128xf32>
    %5 = tpu.matmul %3, %4, %cst_7 {dimension_numbers = #tpu.dot_dimension_numbers<[1], [0], [0], [1], [0, 0, 1, 1], [], []>} : vector<8x34xbf16>, vector<34x128xbf16>, vector<8x128xf32> -> vector<8x128xf32>
    %6 = arith.addf %2, %5 : vector<8x128xf32>
    %c0_8 = arith.constant 0 : index
    %c0_9 = arith.constant 0 : index
    %7 = vector.load %arg3[%c0_8, %c0_9] : memref<8x1xf32, #tpu.memory_space<vmem>>, vector<8x1xf32>
    %8 = vector.broadcast %7 : vector<8x1xf32> to vector<8x128xf32>
    %9 = arith.addf %6, %8 : vector<8x128xf32>
    %10 = arith.negf %9 : vector<8x128xf32>
    %11 = math.exp %10 : vector<8x128xf32>
    %cst_10 = arith.constant 1.000000e+00 : f32
    %12 = vector.broadcast %cst_10 : f32 to vector<8x128xf32>
    %13 = arith.addf %12, %11 : vector<8x128xf32>
    %14 = arith.divf %12, %13 : vector<8x128xf32>
    %c0_11 = arith.constant 0 : index
    %c0_12 = arith.constant 0 : index
    %15 = vector.load %arg6[%c0_11, %c0_12] : memref<8x128xf32, #tpu.memory_space<vmem>>, vector<8x128xf32>
    tpu.vector_store %arg6[%c0_11, %c0_12], %14 {strides = array<i32>} : memref<8x128xf32, #tpu.memory_space<vmem>>, vector<8x128xf32>,
    return
  }
  func.func @transform_0(%arg0: i32) -> (i32, i32) {
    %c0_i32 = arith.constant 0 : i32
    %c0_i32_0 = arith.constant 0 : i32
    %c0_i32_1 = arith.constant 0 : i32
    return %c0_i32, %c0_i32_0 : i32, i32
  }
  func.func @transform_1(%arg0: i32) -> (i32, i32) {
    %c0_i32 = arith.constant 0 : i32
    %c0_i32_0 = arith.constant 0 : i32
    %c0_i32_1 = arith.constant 0 : i32
    return %c0_i32, %c0_i32_0 : i32, i32
  }
  func.func @transform_2(%arg0: i32) -> (i32, i32) {
    %c0_i32 = arith.constant 0 : i32
    %c0_i32_0 = arith.constant 0 : i32
    %c0_i32_1 = arith.constant 0 : i32
    return %c0_i32, %c0_i32_0 : i32, i32
  }
  func.func @transform_3(%arg0: i32) -> (i32, i32) {
    %c0_i32 = arith.constant 0 : i32
    %c0_i32_0 = arith.constant 0 : i32
    return %c0_i32, %arg0 : i32, i32
  }
  func.func @transform_4(%arg0: i32) -> (i32, i32) {
    %c0_i32 = arith.constant 0 : i32
    %c0_i32_0 = arith.constant 0 : i32
    return %c0_i32, %arg0 : i32, i32
  }
  func.func @transform_5(%arg0: i32) -> (i32, i32) {
    %c0_i32 = arith.constant 0 : i32
    %c0_i32_0 = arith.constant 0 : i32
    return %c0_i32, %arg0 : i32, i32
  }
}

</mosaic_0001>

<llo_original>
// kernel: complex_decompress_forward.1
$region0: #{complex_decompress_forward.1}
  #allocation0 [shape = 'u32[]', space=smem, size = 0x4, offset = 0x4, fixed_abs, tag = 'smem constant byte address 0x4 - core index']
  #allocation1 [shape = 'u32[144,128]{1,0:T(1,128)}', space=vmem, size = 0x12000, scoped, tag = 'internal scratch']
  %s0 = inlined_call_operand.vmem [shape: bf16[8,34], index: 0, kind: input, shape index: {}]
  %s1 = inlined_call_operand.vmem [shape: bf16[8,34], index: 1, kind: input, shape index: {}]
  %s2 = inlined_call_operand.vmem [shape: f32[8,1], index: 2, kind: input, shape index: {}]
  %s3 = inlined_call_operand.vmem [shape: bf16[34,512], index: 3, kind: input, shape index: {}]
  %s4 = inlined_call_operand.vmem [shape: bf16[34,512], index: 4, kind: input, shape index: {}]
  %s5 = inlined_call_operand.vmem [shape: f32[8,512], index: 5, kind: output, shape index: {}]
  %s6 = sld [smem:[#allocation0]]
  $region135: #{complex_decompress_forward.1} parent=0
    _
  %s8 = ssub.s32 1, %s6
  %s9 = scalar_select 0, %s8, %s6
  $region1: #{complex_decompress_forward.1} parent=0
    #allocation2 [shape = 'u8[20480]{0}', space=vmem, size = 0x5000, scoped, tag = 'input window, operand 3']
    #allocation3 [shape = 'u8[20480]{0}', space=vmem, size = 0x5000, scoped, tag = 'input window, operand 4']
    loop: start=0, step=1, limit=6
    $region2: #{complex_decompress_forward.1} parent=1 // loop_pre_header
      _
    $region3: #{complex_decompress_forward.1} parent=1 // loop_header
      %s11 = sphi 0, %s15
      %p12 = scmp.ge.s32.totalorder %s11, 6
      %s19 = sphi 0, %s19
      %s21 = sphi 0, %s19
      %s22 = sphi 0, %s21
      %s36 = sphi 0, %s22
      %s40 = sphi 0, %s40
      %s42 = sphi 0, %s40
      %s43 = sphi 0, %s42
      %s57 = sphi 0, %s43
      %s61 = sphi 0, %s61
      %s63 = sphi 0, %s61
      %s64 = sphi 0, %s63
      %s78 = sphi 0, %s64
      %s84 = sphi 0, %s86
      %s87 = sphi 0, %s84
      %s88 = sphi 0, %s87
      %s104 = sphi 0, %s88
      %s110 = sphi 0, %s112
      %s113 = sphi 0, %s110
      %s114 = sphi 0, %s113
      %s130 = sphi 0, %s114
      %s136 = sphi 0, %s138
      %s139 = sphi 0, %s136
      %s140 = sphi 0, %s139
      %s156 = sphi 0, %s140
    $region4: #{complex_decompress_forward.1} parent=1 // loop_header_branch
      %14 = sbr.rel (%p12) target = $region8
    $region5: #{complex_decompress_forward.1} parent=1 // loop_body
      %s16 = ssub.s32 %s11, 1
      %s17 = ssub.s32 %s11, 2
      %s18 = sadd.s32 %s11, 1
      %s20 = sadd.s32 %s19, 1
      %p23 = scmp.eq.s32.totalorder %s11, 3
      %p24 = scmp.ne.s32.totalorder %s19, %s21
      %p25 = scmp.eq.s32.totalorder %s11, 0
      %p26 = por %p24, %p25
      %p27 = scmp.ne.s32.totalorder %s19, %s21
      %p28 = scmp.eq.s32.totalorder %s16, 3
      %p29 = por %p27, %p28
      %p30 = scmp.ne.s32.totalorder %s21, %s22
      %p31 = scmp.eq.s32.totalorder %s16, 0
      %p32 = por %p30, %p31
      %p33 = scmp.ne.s32.totalorder %s21, %s22
      %p34 = scmp.eq.s32.totalorder %s17, 3
      %p35 = por %p33, %p34
      %p37 = scmp.ne.s32.totalorder %s22, %s36
      %p38 = scmp.eq.s32.totalorder %s17, 0
      %p39 = por %p37, %p38
      %s41 = sadd.s32 %s40, 1
      %p44 = scmp.eq.s32.totalorder %s11, 3
      %p45 = scmp.ne.s32.totalorder %s40, %s42
      %p46 = scmp.eq.s32.totalorder %s11, 0
      %p47 = por %p45, %p46
      %p48 = scmp.ne.s32.totalorder %s40, %s42
      %p49 = scmp.eq.s32.totalorder %s16, 3
      %p50 = por %p48, %p49
      %p51 = scmp.ne.s32.totalorder %s42, %s43
      %p52 = scmp.eq.s32.totalorder %s16, 0
      %p53 = por %p51, %p52
      %p54 = scmp.ne.s32.totalorder %s42, %s43
      %p55 = scmp.eq.s32.totalorder %s17, 3
      %p56 = por %p54, %p55
      %p58 = scmp.ne.s32.totalorder %s43, %s57
      %p59 = scmp.eq.s32.totalorder %s17, 0
      %p60 = por %p58, %p59
      %s62 = sadd.s32 %s61, 1
      %p65 = scmp.eq.s32.totalorder %s11, 3
      %p66 = scmp.ne.s32.totalorder %s61, %s63
      %p67 = scmp.eq.s32.totalorder %s11, 0
      %p68 = por %p66, %p67
      %p69 = scmp.ne.s32.totalorder %s61, %s63
      %p70 = scmp.eq.s32.totalorder %s16, 3
      %p71 = por %p69, %p70
      %p72 = scmp.ne.s32.totalorder %s63, %s64
      %p73 = scmp.eq.s32.totalorder %s16, 0
      %p74 = por %p72, %p73
      %p75 = scmp.ne.s32.totalorder %s63, %s64
      %p76 = scmp.eq.s32.totalorder %s17, 3
      %p77 = por %p75, %p76
      %p79 = scmp.ne.s32.totalorder %s64, %s78
      %p80 = scmp.eq.s32.totalorder %s17, 0
      %p81 = por %p79, %p80
      %s82 = ssub.s32 %s11, %s18
      %p83 = scmp.eq.s32.totalorder %s82, 0
      %s85 = sadd.s32 %s84, 1
      %s86 = scalar_select %p83, %s84, %s85
      %p89 = pneg %p83
      %p90 = scmp.eq.s32.totalorder %s11, 3
      %p91 = por %p89, %p90
      %p92 = scmp.ne.s32.totalorder %s84, %s87
      %p93 = scmp.eq.s32.totalorder %s11, 0
      %p94 = por %p92, %p93
      %p95 = scmp.ne.s32.totalorder %s84, %s87
      %p96 = scmp.eq.s32.totalorder %s16, 3
      %p97 = por %p95, %p96
      %p98 = scmp.ne.s32.totalorder %s87, %s88
      %p99 = scmp.eq.s32.totalorder %s16, 0
      %p100 = por %p98, %p99
      %p101 = scmp.ne.s32.totalorder %s87, %s88
      %p102 = scmp.eq.s32.totalorder %s17, 3
      %p103 = por %p101, %p102
      %p105 = scmp.ne.s32.totalorder %s88, %s104
      %p106 = scmp.eq.s32.totalorder %s17, 0
      %p107 = por %p105, %p106
      %s108 = ssub.s32 %s11, %s18
      %p109 = scmp.eq.s32.totalorder %s108, 0
      %s111 = sadd.s32 %s110, 1
      %s112 = scalar_select %p109, %s110, %s111
      %p115 = pneg %p109
      %p116 = scmp.eq.s32.totalorder %s11, 3
      %p117 = por %p115, %p116
      %p118 = scmp.ne.s32.totalorder %s110, %s113
      %p119 = scmp.eq.s32.totalorder %s11, 0
      %p120 = por %p118, %p119
      %p121 = scmp.ne.s32.totalorder %s110, %s113
      %p122 = scmp.eq.s32.totalorder %s16, 3
      %p123 = por %p121, %p122
      %p124 = scmp.ne.s32.totalorder %s113, %s114
      %p125 = scmp.eq.s32.totalorder %s16, 0
      %p126 = por %p124, %p125
      %p127 = scmp.ne.s32.totalorder %s113, %s114
      %p128 = scmp.eq.s32.totalorder %s17, 3
      %p129 = por %p127, %p128
      %p131 = scmp.ne.s32.totalorder %s114, %s130
      %p132 = scmp.eq.s32.totalorder %s17, 0
      %p133 = por %p131, %p132
      %s134 = ssub.s32 %s11, %s18
      %p135 = scmp.eq.s32.totalorder %s134, 0
      %s137 = sadd.s32 %s136, 1
      %s138 = scalar_select %p135, %s136, %s137
      %p141 = pneg %p135
      %p142 = scmp.eq.s32.totalorder %s11, 3
      %p143 = por %p141, %p142
      %p144 = scmp.ne.s32.totalorder %s136, %s139
      %p145 = scmp.eq.s32.totalorder %s11, 0
      %p146 = por %p144, %p145
      %p147 = scmp.ne.s32.totalorder %s136, %s139
      %p148 = scmp.eq.s32.totalorder %s16, 3
      %p149 = por %p147, %p148
      %p150 = scmp.ne.s32.totalorder %s139, %s140
      %p151 = scmp.eq.s32.totalorder %s16, 0
      %p152 = por %p150, %p151
      %p153 = scmp.ne.s32.totalorder %s139, %s140
      %p154 = scmp.eq.s32.totalorder %s17, 3
      %p155 = por %p153, %p154
      %p157 = scmp.ne.s32.totalorder %s140, %s156
      %p158 = scmp.eq.s32.totalorder %s17, 0
      %p159 = por %p157, %p158
      %p160 = scmp.le.s32.totalorder 1, %s11
      %p161 = scmp.lt.s32.totalorder %s11, 5
      %p162 = pnand %p160, %p161
      %p163 = pneg %p162
      // Predicated region
      $region9: #{complex_decompress_forward.1} parent=5 // pred_check
        _
      $region10: #{complex_decompress_forward.1} parent=5 // pred_check_branch
        %165 = sbr.rel (%p162) target = $region12
      $region11: #{complex_decompress_forward.1} parent=5 // pred_region
        %s166 = ssub.s32 %s11, 1
        // Predicated region
        $region13: #{complex_decompress_forward.1} parent=11 // pred_check
          %p167 = pneg %p32
        $region14: #{complex_decompress_forward.1} parent=11 // pred_check_branch
          %169 = sbr.rel (%p167) target = $region16
        $region15: #{complex_decompress_forward.1} parent=11 // pred_region
          _
        $region16: #{complex_decompress_forward.1} parent=11 // pred_fallthru
          _
        // Predicated region
        $region17: #{complex_decompress_forward.1} parent=11 // pred_check
          %p170 = pneg %p53
        $region18: #{complex_decompress_forward.1} parent=11 // pred_check_branch
          %172 = sbr.rel (%p170) target = $region20
        $region19: #{complex_decompress_forward.1} parent=11 // pred_region
          _
        $region20: #{complex_decompress_forward.1} parent=11 // pred_fallthru
          _
        // Predicated region
        $region21: #{complex_decompress_forward.1} parent=11 // pred_check
          %p173 = pneg %p74
        $region22: #{complex_decompress_forward.1} parent=11 // pred_check_branch
          %175 = sbr.rel (%p173) target = $region24
        $region23: #{complex_decompress_forward.1} parent=11 // pred_region
          _
        $region24: #{complex_decompress_forward.1} parent=11 // pred_fallthru
          _
      $region12: #{complex_decompress_forward.1} parent=5 // pred_fallthru
        _
      %p176 = scmp.lt.s32.totalorder %s11, 4
      // Predicated region
      $region25: #{complex_decompress_forward.1} parent=5 // pred_check
        %p177 = pneg %p176
      $region26: #{complex_decompress_forward.1} parent=5 // pred_check_branch
        %179 = sbr.rel (%p177) target = $region28
      $region27: #{complex_decompress_forward.1} parent=5 // pred_region
        // Predicated region
        $region29: #{complex_decompress_forward.1} parent=27 // pred_check
          %p180 = pneg %p94
        $region30: #{complex_decompress_forward.1} parent=27 // pred_check_branch
          %182 = sbr.rel (%p180) target = $region32
        $region31: #{complex_decompress_forward.1} parent=27 // pred_region
          %s183 = sand.u32 %s84, 1
          %s184 = sand.u32 %s84, 1
          %s185 = smul.addr %s184, 20
          %s186 = scalar_lea.vmem [#allocation2], %s185
          %s187 = smul.addr %s11, 4
          %s188 = scalar_lea.vmem %s3, %s187
          // Predicated region
          $region33: #{complex_decompress_forward.1} parent=31 // pred_check
            _
          $region34: #{complex_decompress_forward.1} parent=31 // pred_check_branch
            %190 = sbr.rel (0) target = $region36
          $region35: #{complex_decompress_forward.1} parent=31 // pred_region
            // Predicated region
            $region37: #{complex_decompress_forward.1} parent=35 // pred_check
              _
            $region38: #{complex_decompress_forward.1} parent=35 // pred_check_branch
              %192 = sbr.rel target = $region40
            $region39: #{complex_decompress_forward.1} parent=35 // pred_region
              // Predicated region
              $region52: #{complex_decompress_forward.1} parent=39 // pred_check
                _
              $region53: #{complex_decompress_forward.1} parent=39 // pred_check_branch
                %215 = sbr.rel (0) target = $region55
              $region54: #{complex_decompress_forward.1} parent=39 // pred_region
                loop: start=0, step=1, limit=1
                $region56: #{complex_decompress_forward.1} parent=54 // loop_pre_header
                  _
                $region57: #{complex_decompress_forward.1} parent=54 // loop_header
                  %s217 = sphi 0, %s221
                  %p218 = scmp.ge.s32.totalorder %s217, 1
                  %s222 = sphi %s188, %s188
                  %s223 = sphi %s186, %s186
                $region58: #{complex_decompress_forward.1} parent=54 // loop_header_branch
                  %220 = sbr.rel (%p218) target = $region62
                $region59: #{complex_decompress_forward.1} parent=54 // loop_body
                  _
                $region60: #{complex_decompress_forward.1} parent=54 // loop_footer
                  %s221 = sadd.s32 1, %s217
                $region61: #{complex_decompress_forward.1} parent=54 // loop_footer_branch
                  %216 = sbr.rel target = $region57
                $region62: #{complex_decompress_forward.1} parent=54 // loop_exit
                  _
                loop: start=0, step=1, limit=1
                $region63: #{complex_decompress_forward.1} parent=54 // loop_pre_header
                  _
                $region64: #{complex_decompress_forward.1} parent=54 // loop_header
                  %s226 = sphi 0, %s230
                  %p227 = scmp.ge.s32.totalorder %s226, 1
                  %s231 = sphi %s188, %s188
                  %s232 = sphi %s186, %s186
                $region65: #{complex_decompress_forward.1} parent=54 // loop_header_branch
                  %229 = sbr.rel (%p227) target = $region69
                $region66: #{complex_decompress_forward.1} parent=54 // loop_body
                  %v233 = vld [vmem:[%s231] sm:$0xf]
                  %234 = vst [vmem:[%s232] sm:$0xf] %v233
                  %v235 = vld [vmem:[%s231 + $0x10] sm:$0xf]
                  %236 = vst [vmem:[%s232 + $0x4] sm:$0xf] %v235
                  %v237 = vld [vmem:[%s231 + $0x20] sm:$0xf]
                  %238 = vst [vmem:[%s232 + $0x8] sm:$0xf] %v237
                  %v239 = vld [vmem:[%s231 + $0x30] sm:$0xf]
                  %240 = vst [vmem:[%s232 + $0xc] sm:$0xf] %v239
                  %v241 = vld [vmem:[%s231 + $0x40] sm:$0xf]
                  %242 = vst [vmem:[%s232 + $0x10] sm:$0xf] %v241
                $region67: #{complex_decompress_forward.1} parent=54 // loop_footer
                  %s230 = sadd.s32 1, %s226
                $region68: #{complex_decompress_forward.1} parent=54 // loop_footer_branch
                  %225 = sbr.rel target = $region64
                $region69: #{complex_decompress_forward.1} parent=54 // loop_exit
                  _
              $region55: #{complex_decompress_forward.1} parent=39 // pred_fallthru
                _
            $region40: #{complex_decompress_forward.1} parent=35 // pred_fallthru
              _
            // Predicated region
            $region41: #{complex_decompress_forward.1} parent=35 // pred_check
              _
            $region42: #{complex_decompress_forward.1} parent=35 // pred_check_branch
              %194 = sbr.rel (0) target = $region44
            $region43: #{complex_decompress_forward.1} parent=35 // pred_region
              loop: start=0, step=1, limit=1
              $region45: #{complex_decompress_forward.1} parent=43 // loop_pre_header
                _
              $region46: #{complex_decompress_forward.1} parent=43 // loop_header
                %s197 = sphi 0, %s201
                %p198 = scmp.ge.s32.totalorder %s197, 1
                %s202 = sphi %s188, %s188
                %s203 = sphi %s186, %s186
              $region47: #{complex_decompress_forward.1} parent=43 // loop_header_branch
                %200 = sbr.rel (%p198) target = $region51
              $region48: #{complex_decompress_forward.1} parent=43 // loop_body
                %v204 = vld [vmem:[%s202] sm:$0xf]
                %205 = vst [vmem:[%s203] sm:$0xf] %v204
                %v206 = vld [vmem:[%s202 + $0x10] sm:$0xf]
                %207 = vst [vmem:[%s203 + $0x4] sm:$0xf] %v206
                %v208 = vld [vmem:[%s202 + $0x20] sm:$0xf]
                %209 = vst [vmem:[%s203 + $0x8] sm:$0xf] %v208
                %v210 = vld [vmem:[%s202 + $0x30] sm:$0xf]
                %211 = vst [vmem:[%s203 + $0xc] sm:$0xf] %v210
                %v212 = vld [vmem:[%s202 + $0x40] sm:$0xf]
                %213 = vst [vmem:[%s203 + $0x10] sm:$0xf] %v212
              $region49: #{complex_decompress_forward.1} parent=43 // loop_footer
                %s201 = sadd.s32 1, %s197
              $region50: #{complex_decompress_forward.1} parent=43 // loop_footer_branch
                %196 = sbr.rel target = $region46
              $region51: #{complex_decompress_forward.1} parent=43 // loop_exit
                _
            $region44: #{complex_decompress_forward.1} parent=35 // pred_fallthru
              _
          $region36: #{complex_decompress_forward.1} parent=31 // pred_fallthru
            _
          %243 = vnop
        $region32: #{complex_decompress_forward.1} parent=27 // pred_fallthru
          _
        // Predicated region
        $region70: #{complex_decompress_forward.1} parent=27 // pred_check
          %p244 = pneg %p120
        $region71: #{complex_decompress_forward.1} parent=27 // pred_check_branch
          %246 = sbr.rel (%p244) target = $region73
        $region72: #{complex_decompress_forward.1} parent=27 // pred_region
          %s247 = sand.u32 %s110, 1
          %s248 = sand.u32 %s110, 1
          %s249 = smul.addr %s248, 20
          %s250 = scalar_lea.vmem [#allocation3], %s249
          %s251 = smul.addr %s11, 4
          %s252 = scalar_lea.vmem %s4, %s251
          // Predicated region
          $region74: #{complex_decompress_forward.1} parent=72 // pred_check
            _
          $region75: #{complex_decompress_forward.1} parent=72 // pred_check_branch
            %254 = sbr.rel (0) target = $region77
          $region76: #{complex_decompress_forward.1} parent=72 // pred_region
            // Predicated region
            $region78: #{complex_decompress_forward.1} parent=76 // pred_check
              _
            $region79: #{complex_decompress_forward.1} parent=76 // pred_check_branch
              %256 = sbr.rel target = $region81
            $region80: #{complex_decompress_forward.1} parent=76 // pred_region
              // Predicated region
              $region93: #{complex_decompress_forward.1} parent=80 // pred_check
                _
              $region94: #{complex_decompress_forward.1} parent=80 // pred_check_branch
                %279 = sbr.rel (0) target = $region96
              $region95: #{complex_decompress_forward.1} parent=80 // pred_region
                loop: start=0, step=1, limit=1
                $region97: #{complex_decompress_forward.1} parent=95 // loop_pre_header
                  _
                $region98: #{complex_decompress_forward.1} parent=95 // loop_header
                  %s281 = sphi 0, %s285
                  %p282 = scmp.ge.s32.totalorder %s281, 1
                  %s286 = sphi %s252, %s252
                  %s287 = sphi %s250, %s250
                $region99: #{complex_decompress_forward.1} parent=95 // loop_header_branch
                  %284 = sbr.rel (%p282) target = $region103
                $region100: #{complex_decompress_forward.1} parent=95 // loop_body
                  _
                $region101: #{complex_decompress_forward.1} parent=95 // loop_footer
                  %s285 = sadd.s32 1, %s281
                $region102: #{complex_decompress_forward.1} parent=95 // loop_footer_branch
                  %280 = sbr.rel target = $region98
                $region103: #{complex_decompress_forward.1} parent=95 // loop_exit
                  _
                loop: start=0, step=1, limit=1
                $region104: #{complex_decompress_forward.1} parent=95 // loop_pre_header
                  _
                $region105: #{complex_decompress_forward.1} parent=95 // loop_header
                  %s290 = sphi 0, %s294
                  %p291 = scmp.ge.s32.totalorder %s290, 1
                  %s295 = sphi %s252, %s252
                  %s296 = sphi %s250, %s250
                $region106: #{complex_decompress_forward.1} parent=95 // loop_header_branch
                  %293 = sbr.rel (%p291) target = $region110
                $region107: #{complex_decompress_forward.1} parent=95 // loop_body
                  %v297 = vld [vmem:[%s295] sm:$0xf]
                  %298 = vst [vmem:[%s296] sm:$0xf] %v297
                  %v299 = vld [vmem:[%s295 + $0x10] sm:$0xf]
                  %300 = vst [vmem:[%s296 + $0x4] sm:$0xf] %v299
                  %v301 = vld [vmem:[%s295 + $0x20] sm:$0xf]
                  %302 = vst [vmem:[%s296 + $0x8] sm:$0xf] %v301
                  %v303 = vld [vmem:[%s295 + $0x30] sm:$0xf]
                  %304 = vst [vmem:[%s296 + $0xc] sm:$0xf] %v303
                  %v305 = vld [vmem:[%s295 + $0x40] sm:$0xf]
                  %306 = vst [vmem:[%s296 + $0x10] sm:$0xf] %v305
                $region108: #{complex_decompress_forward.1} parent=95 // loop_footer
                  %s294 = sadd.s32 1, %s290
                $region109: #{complex_decompress_forward.1} parent=95 // loop_footer_branch
                  %289 = sbr.rel target = $region105
                $region110: #{complex_decompress_forward.1} parent=95 // loop_exit
                  _
              $region96: #{complex_decompress_forward.1} parent=80 // pred_fallthru
                _
            $region81: #{complex_decompress_forward.1} parent=76 // pred_fallthru
              _
            // Predicated region
            $region82: #{complex_decompress_forward.1} parent=76 // pred_check
              _
            $region83: #{complex_decompress_forward.1} parent=76 // pred_check_branch
              %258 = sbr.rel (0) target = $region85
            $region84: #{complex_decompress_forward.1} parent=76 // pred_region
              loop: start=0, step=1, limit=1
              $region86: #{complex_decompress_forward.1} parent=84 // loop_pre_header
                _
              $region87: #{complex_decompress_forward.1} parent=84 // loop_header
                %s261 = sphi 0, %s265
                %p262 = scmp.ge.s32.totalorder %s261, 1
                %s266 = sphi %s252, %s252
                %s267 = sphi %s250, %s250
              $region88: #{complex_decompress_forward.1} parent=84 // loop_header_branch
                %264 = sbr.rel (%p262) target = $region92
              $region89: #{complex_decompress_forward.1} parent=84 // loop_body
                %v268 = vld [vmem:[%s266] sm:$0xf]
                %269 = vst [vmem:[%s267] sm:$0xf] %v268
                %v270 = vld [vmem:[%s266 + $0x10] sm:$0xf]
                %271 = vst [vmem:[%s267 + $0x4] sm:$0xf] %v270
                %v272 = vld [vmem:[%s266 + $0x20] sm:$0xf]
                %273 = vst [vmem:[%s267 + $0x8] sm:$0xf] %v272
                %v274 = vld [vmem:[%s266 + $0x30] sm:$0xf]
                %275 = vst [vmem:[%s267 + $0xc] sm:$0xf] %v274
                %v276 = vld [vmem:[%s266 + $0x40] sm:$0xf]
                %277 = vst [vmem:[%s267 + $0x10] sm:$0xf] %v276
              $region90: #{complex_decompress_forward.1} parent=84 // loop_footer
                %s265 = sadd.s32 1, %s261
              $region91: #{complex_decompress_forward.1} parent=84 // loop_footer_branch
                %260 = sbr.rel target = $region87
              $region92: #{complex_decompress_forward.1} parent=84 // loop_exit
                _
            $region85: #{complex_decompress_forward.1} parent=76 // pred_fallthru
              _
          $region77: #{complex_decompress_forward.1} parent=72 // pred_fallthru
            _
          %307 = vnop
        $region73: #{complex_decompress_forward.1} parent=27 // pred_fallthru
          _
      $region28: #{complex_decompress_forward.1} parent=5 // pred_fallthru
        _
      %p308 = scmp.le.s32.totalorder 1, %s11
      %p309 = scmp.lt.s32.totalorder %s11, 5
      %p310 = pnand %p308, %p309
      %p311 = pneg %p310
      // Predicated region
      $region111: #{complex_decompress_forward.1} parent=5 // pred_check
        _
      $region112: #{complex_decompress_forward.1} parent=5 // pred_check_branch
        %313 = sbr.rel (%p310) target = $region114
      $region113: #{complex_decompress_forward.1} parent=5 // pred_region
        %s314 = ssub.s32 %s11, 1
        %s315 = sand.u32 %s87, 1
        %s316 = sand.u32 %s87, 1
        %s317 = smul.addr %s316, 20
        %s318 = scalar_lea.vmem [#allocation2], %s317
        // Predicated region
        $region115: #{complex_decompress_forward.1} parent=113 // pred_check
          %p319 = pneg %p100
        $region116: #{complex_decompress_forward.1} parent=113 // pred_check_branch
          %321 = sbr.rel (%p319) target = $region118
        $region117: #{complex_decompress_forward.1} parent=113 // pred_region
          _
        $region118: #{complex_decompress_forward.1} parent=113 // pred_fallthru
          _
        %s322 = sand.u32 %s113, 1
        %s323 = sand.u32 %s113, 1
        %s324 = smul.addr %s323, 20
        %s325 = scalar_lea.vmem [#allocation3], %s324
        // Predicated region
        $region119: #{complex_decompress_forward.1} parent=113 // pred_check
          %p326 = pneg %p126
        $region120: #{complex_decompress_forward.1} parent=113 // pred_check_branch
          %328 = sbr.rel (%p326) target = $region122
        $region121: #{complex_decompress_forward.1} parent=113 // pred_region
          _
        $region122: #{complex_decompress_forward.1} parent=113 // pred_fallthru
          _
        %p329 = pneg %p32
        %p330 = pneg %p29
        %p331 = pneg %p53
        %p332 = pneg %p50
        %p333 = pneg %p74
        %p334 = pneg %p71
        %s335 = sand.u32 %s87, 1
        %s336 = sand.u32 %s87, 1
        %s337 = smul.addr %s336, 20
        %s338 = scalar_lea.vmem [#allocation2], %s337
        %p339 = pneg %p100
        %p340 = pneg %p97
        %s341 = sand.u32 %s113, 1
        %s342 = sand.u32 %s113, 1
        %s343 = smul.addr %s342, 20
        %s344 = scalar_lea.vmem [#allocation3], %s343
        %p345 = pneg %p126
        %p346 = pneg %p123
        %p347 = pneg %p152
        %p348 = pneg %p149
        %p349 = scmp.lt.s32.totalorder %s16, 3
        %s350 = scalar_select %p349, %s16, 3
        %s351 = smul.addr %s350, 8
        %s352 = scalar_lea.vmem %s5, %s351
        %p353 = scmp.lt.s32.totalorder %s16, 3
        %s354 = scalar_select %p353, %s16, 3
        %s355 = smul.addr %s354, 8
        %s356 = scalar_lea.vmem %s5, %s355
        %v358 = vld [vmem:[%s0] sm:$0xf]
        %v359 = vld [vmem:[%s318] sm:$0xf]
        %v360 = vld [vmem:[%s318 + $0x4] sm:$0xf]
        %v361 = vld [vmem:[%s318 + $0x8] sm:$0xf]
        %v362 = vld [vmem:[%s318 + $0xc] sm:$0xf]
        %v363 = vld [vmem:[%s318 + $0x10] sm:$0x1]
        %v364 = vld [vmem:[%s1] sm:$0xf]
        %v365 = vld [vmem:[%s325] sm:$0xf]
        %v366 = vld [vmem:[%s325 + $0x4] sm:$0xf]
        %v367 = vld [vmem:[%s325 + $0x8] sm:$0xf]
        %v368 = vld [vmem:[%s325 + $0xc] sm:$0xf]
        %v369 = vld [vmem:[%s325 + $0x10] sm:$0x1]
        %v375 = vunpack.c.l.b16 %v365
        %v376 = vunpack.c.l.b16 %v366
        %v377 = vunpack.c.l.b16 %v367
        %v378 = vunpack.c.l.b16 %v368
        %v379 = vunpack.c.l.b16 %v369
        %v380 = vpack.c.b16 %v376, %v375
        %v381 = vpack.c.b16 %v378, %v377
        %v382 = vpack.c.b16 %v379, %v379
        %vm385 = vcmask 277504
        %v387 = vsel %vm385, %v364, 0
        %vm389 = vcmask 1040384
        %v391 = vsel %vm389, %v382, 0
        %393 = vmatprep.subr.bf16.mxu0 0
        %394 = vmatpush1.bf16.msra.mxu0 %v380
        %395 = vmatprep.subr.bf16.mxu0 0
        %396 = vmatpush1.bf16.msra.mxu0 %v381
        %397 = vmatprep.subr.bf16.mxu0 0
        %398 = vmatpush1.bf16.msra.mxu0 %v391
        %399 = vmatprep.subr.bf16.mxu0 0
        %400 = vmatpush1.bf16.msra.mxu0 0
        %401 = vmatprep.subr.bf16.mxu0 0
        %402 = vmatpush1.bf16.msra.mxu0 0
        %403 = vmatprep.subr.bf16.mxu0 0
        %404 = vmatpush1.bf16.msra.mxu0 0
        %405 = vmatprep.subr.bf16.mxu0 0
        %406 = vmatpush1.bf16.msra.mxu0 0
        %407 = vmatprep.subr.bf16.mxu0 0
        %408 = vmatpush1.bf16.msra.mxu0 0
        %409 = vmatprep.subr.bf16.mxu0 0
        %410 = vmatpush1.bf16.msra.mxu0 0
        %411 = vmatprep.subr.bf16.mxu0 0
        %412 = vmatpush1.bf16.msra.mxu0 0
        %413 = vmatprep.subr.bf16.mxu0 0
        %414 = vmatpush1.bf16.msra.mxu0 0
        %415 = vmatprep.subr.bf16.mxu0 0
        %416 = vmatpush1.bf16.msra.mxu0 0
        %417 = vmatprep.subr.bf16.mxu0 0
        %418 = vmatpush1.bf16.msra.mxu0 0
        %419 = vmatprep.subr.bf16.mxu0 0
        %420 = vmatpush1.bf16.msra.mxu0 0
        %421 = vmatprep.subr.bf16.mxu0 0
        %422 = vmatpush1.bf16.msra.mxu0 0
        %423 = vmatprep.subr.bf16.mxu0 0
        %424 = vmatpush1.bf16.msra.mxu0 0
        %425 = vmatprep.mubr.bf16.mxu0 0
        %426 = vmatmul.mubr.bf16.gmra.mrb[0].mxu0 %v387
        %v427 = vpop.f32.mrb[0].mxu0
        %v428 = vadd.f32 0.0, %v427
        %v429 = vpop.f32.mrb[0].mxu0
        %v430 = vpop.f32.mrb[0].mxu0
        %v431 = vpop.f32.mrb[0].mxu0
        %432 = vdwg.mxu0
        %v438 = vunpack.c.l.b16 %v359
        %v439 = vunpack.c.l.b16 %v360
        %v440 = vunpack.c.l.b16 %v361
        %v441 = vunpack.c.l.b16 %v362
        %v442 = vunpack.c.l.b16 %v363
        %v443 = vpack.c.b16 %v439, %v438
        %v444 = vpack.c.b16 %v441, %v440
        %v445 = vpack.c.b16 %v442, %v442
        %v449 = vsel %vm385, %v358, 0
        %v452 = vsel %vm389, %v445, 0
        %454 = vmatprep.subr.bf16.mxu0 0
        %455 = vmatpush1.bf16.msra.mxu0 %v443
        %456 = vmatprep.subr.bf16.mxu0 0
        %457 = vmatpush1.bf16.msra.mxu0 %v444
        %458 = vmatprep.subr.bf16.mxu0 0
        %459 = vmatpush1.bf16.msra.mxu0 %v452
        %460 = vmatprep.subr.bf16.mxu0 0
        %461 = vmatpush1.bf16.msra.mxu0 0
        %462 = vmatprep.subr.bf16.mxu0 0
        %463 = vmatpush1.bf16.msra.mxu0 0
        %464 = vmatprep.subr.bf16.mxu0 0
        %465 = vmatpush1.bf16.msra.mxu0 0
        %466 = vmatprep.subr.bf16.mxu0 0
        %467 = vmatpush1.bf16.msra.mxu0 0
        %468 = vmatprep.subr.bf16.mxu0 0
        %469 = vmatpush1.bf16.msra.mxu0 0
        %470 = vmatprep.subr.bf16.mxu0 0
        %471 = vmatpush1.bf16.msra.mxu0 0
        %472 = vmatprep.subr.bf16.mxu0 0
        %473 = vmatpush1.bf16.msra.mxu0 0
        %474 = vmatprep.subr.bf16.mxu0 0
        %475 = vmatpush1.bf16.msra.mxu0 0
        %476 = vmatprep.subr.bf16.mxu0 0
        %477 = vmatpush1.bf16.msra.mxu0 0
        %478 = vmatprep.subr.bf16.mxu0 0
        %479 = vmatpush1.bf16.msra.mxu0 0
        %480 = vmatprep.subr.bf16.mxu0 0
        %481 = vmatpush1.bf16.msra.mxu0 0
        %482 = vmatprep.subr.bf16.mxu0 0
        %483 = vmatpush1.bf16.msra.mxu0 0
        %484 = vmatprep.subr.bf16.mxu0 0
        %485 = vmatpush1.bf16.msra.mxu0 0
        %486 = vmatprep.mubr.bf16.mxu0 0
        %487 = vmatmul.mubr.bf16.gmra.mrb[0].mxu0 %v449
        %v488 = vpop.f32.mrb[0].mxu0
        %v489 = vadd.f32 %v428, %v488
        %v490 = vpop.f32.mrb[0].mxu0
        %v491 = vpop.f32.mrb[0].mxu0
        %v492 = vpop.f32.mrb[0].mxu0
        %493 = vdwg.mxu0
        %v494 = vld [vmem:[%s2] sm:$0xff]
        %496 = vset.pattern.permute.xlu0 0
        %497 = vperm.xlu0 %496, %v494
        %v498 = vpop.permute.xlu0 %497
        %v500 = vadd.f32 %v489, %v498
        %v501 = vxor.u32 %v500, 2147483648
        %v502 = vmul.f32 %v501, 1.442695
        %v503 = vpow.pop %v502
        %v504 = vadd.f32 %v503, 1.0
        %v505 = vrcp.pop %v504
        %v506 = vmul.f32 1.0, %v505
        %507 = vst [vmem:[%s356] sm:$0xff] %v506
        %p508 = scmp.lt.s32.totalorder %s16, 3
        %s509 = scalar_select %p508, %s16, 3
        %s510 = smul.addr %s509, 8
        %s511 = scalar_lea.vmem %s5, %s510
        // Predicated region
        $region123: #{complex_decompress_forward.1} parent=113 // pred_check
          %p512 = pneg %p149
        $region124: #{complex_decompress_forward.1} parent=113 // pred_check_branch
          %514 = sbr.rel (%p512) target = $region126
        $region125: #{complex_decompress_forward.1} parent=113 // pred_region
          _
        $region126: #{complex_decompress_forward.1} parent=113 // pred_fallthru
          _
      $region114: #{complex_decompress_forward.1} parent=5 // pred_fallthru
        _
      %p515 = scmp.le.s32.totalorder 2, %s11
      // Predicated region
      $region127: #{complex_decompress_forward.1} parent=5 // pred_check
        %p516 = pneg %p515
      $region128: #{complex_decompress_forward.1} parent=5 // pred_check_branch
        %518 = sbr.rel (%p516) target = $region130
      $region129: #{complex_decompress_forward.1} parent=5 // pred_region
        %s519 = ssub.s32 %s11, 2
        // Predicated region
        $region131: #{complex_decompress_forward.1} parent=129 // pred_check
          %p520 = pneg %p155
        $region132: #{complex_decompress_forward.1} parent=129 // pred_check_branch
          %522 = sbr.rel (%p520) target = $region134
        $region133: #{complex_decompress_forward.1} parent=129 // pred_region
          %p523 = scmp.lt.s32.totalorder %s17, 3
          %s524 = scalar_select %p523, %s17, 3
          %s525 = smul.addr %s524, 8
          %s526 = scalar_lea.vmem %s5, %s525
        $region134: #{complex_decompress_forward.1} parent=129 // pred_fallthru
          _
      $region130: #{complex_decompress_forward.1} parent=5 // pred_fallthru
        _
    $region6: #{complex_decompress_forward.1} parent=1 // loop_footer
      %s15 = sadd.s32 1, %s11
    $region7: #{complex_decompress_forward.1} parent=1 // loop_footer_branch
      %10 = sbr.rel target = $region3
    $region8: #{complex_decompress_forward.1} parent=1 // loop_exit
      _

</llo_original>
